<compile_context>
chip_gen: v7x
topology: tpu7x:2x2x1
jax: 0.10.0
libtpu: 0.0.40
codegen_flags: <defaults>
</compile_context>

<pallas_src>
import jax
import jax.numpy as jnp
from jax.experimental import pallas as pl
from jax.experimental.pallas import tpu as pltpu

BN_EPS = 1e-5


def _round_up(x, m):
    return (x + m - 1) // m * m


def _pick_tiles(N, Cin, Cout, HWp, itemsize):
    """Pick (TM, Nb): spatial tile + batch fold so each grid step moves a large
    HBM slab (amortizes ~0.35us/step fixed overhead) while the double-buffered
    working set stays well under every generation's scoped VMEM budget."""
    TM = HWp
    for t in (32768, 16384, 8192, 4096, 2048, 1024, 512, 256, 128):
        if HWp % t == 0:
            TM = t
            break
    cin_p = _round_up(Cin, 8)       # f32 sublane padding of the x block
    cout_p = _round_up(Cout, 8)
    vmem_cap = 8 * 1024 * 1024      # conservative vs 16 MiB v5e scoped default

    def working_set(nb):
        x_tile = nb * cin_p * TM * itemsize
        o_tile = nb * cout_p * TM * 4
        return 2 * (x_tile + o_tile)  # double-buffered input + output

    Nb = 1
    for cand in range(min(N, 8), 0, -1):   # cap static unroll at 8 elems / step
        if N % cand == 0 and working_set(cand) <= vmem_cap:
            Nb = cand
            break
    return TM, Nb


def bn_stats_kernel(x_ref, s_ref, g_ref):
    # x_ref: (Nb, Cin, TM) native dtype.  x-only sufficient statistics:
    #   s_ref (Cin, 1)   += sum_m x
    #   g_ref (Cin, Cin) += x @ x^T   (one MXU contraction over TM per batch elem)
    @pl.when((pl.program_id(1) == 0) & (pl.program_id(2) == 0))
    def _():
        s_ref[...] = jnp.zeros_like(s_ref)
        g_ref[...] = jnp.zeros_like(g_ref)

    s = s_ref[...]
    g = g_ref[...]
    for b in range(x_ref.shape[0]):        # Nb <= 8, static unroll
        xb = x_ref[b]                      # (Cin, TM)
        s = s + jnp.sum(xb.astype(jnp.float32), axis=-1, keepdims=True)
        g = g + jax.lax.dot_general(
            xb, xb,
            dimension_numbers=(((1,), (1,)), ((), ())),   # x @ x^T
            preferred_element_type=jnp.float32)
    s_ref[...] = s
    g_ref[...] = g


def bn_apply_kernel(x_ref, w_ref, scale_ref, shift_ref, o_ref):
    # Fused conv + folded-BN affine + ReLU on one lane-dense tile.
    w = w_ref[...]             # (Cout, Cin), same dtype as x
    scale = scale_ref[...]     # (Cout, 1) f32
    shift = shift_ref[...]     # (Cout, 1) f32
    for b in range(x_ref.shape[0]):        # Nb <= 8, static unroll
        y = jnp.dot(w, x_ref[b], preferred_element_type=jnp.float32)  # (Cout, TM)
        o_ref[b] = jnp.maximum(y * scale + shift, 0.0).astype(o_ref.dtype)


def conv1x1_forward(x_nchw, w, b, gamma, beta):
    """x_nchw: (N, Cin, H, W); w: (Cout, Cin) or (Cout, Cin, 1, 1); b/gamma/beta: (Cout,).

    Conv bias `b` is mathematically cancelled by training-mode BatchNorm mean
    subtraction, so it is accepted but never enters the kernels.
    """
    del b  # exactly cancelled by BN mean subtraction (training-mode BN only)
    N, Cin, H, W = x_nchw.shape
    Cout = gamma.shape[0]
    HW = H * W

    # NCHW -> (N, Cin, H*W): pure reshape, keep the native dtype (no f32 upcast).
    x3 = x_nchw.reshape(N, Cin, HW)
    HWp = _round_up(max(HW, 128), 128)
    if HWp != HW:
        # Zero padding keeps stores lane-dense; zeros contribute nothing to s / G.
        x3 = jnp.pad(x3, ((0, 0), (0, 0), (0, HWp - HW)))

    w2 = w.reshape(Cout, Cin).astype(x3.dtype)
    itemsize = jnp.dtype(x3.dtype).itemsize
    TM, Nb = _pick_tiles(N, Cin, Cout, HWp, itemsize)
    Ng = N // Nb
    Mg = HWp // TM

    # ---- Pass 1: x-only sufficient statistics (sum, Gram) --------------------
    # Optional 2-way split of the reduction via a leading "parallel" axis so
    # v7x's two TensorCores each own a partial accumulator.
    if Mg % 2 == 0:
        n_split, Ng1, Mg1 = 2, Ng, Mg // 2
        x_map1 = lambda c, n, m: (n, 0, c * Mg1 + m)
    elif Ng % 2 == 0:
        n_split, Ng1, Mg1 = 2, Ng // 2, Mg
        x_map1 = lambda c, n, m: (c * Ng1 + n, 0, m)
    else:
        n_split, Ng1, Mg1 = 1, Ng, Mg
        x_map1 = lambda c, n, m: (n, 0, m)

    s_parts, g_parts = pl.pallas_call(
        bn_stats_kernel,
        out_shape=(
            jax.ShapeDtypeStruct((n_split, Cin, 1), jnp.float32),
            jax.ShapeDtypeStruct((n_split, Cin, Cin), jnp.float32),
        ),
        grid=(n_split, Ng1, Mg1),
        in_specs=[pl.BlockSpec((Nb, Cin, TM), x_map1)],
        out_specs=(
            pl.BlockSpec((None, Cin, 1), lambda c, n, m: (c, 0, 0)),
            pl.BlockSpec((None, Cin, Cin), lambda c, n, m: (c, 0, 0)),
        ),
        compiler_params=pltpu.CompilerParams(
            dimension_semantics=("parallel", "arbitrary", "arbitrary")),
    )(x3)

    # ---- Fold BN stats into a single per-channel scale/shift (tiny, plain JAX) --
    cnt = jnp.float32(N * HW)                      # real positions (pad excluded)
    s_tot = jnp.sum(s_parts, axis=0)[:, 0]         # (Cin,)
    gram = jnp.sum(g_parts, axis=0)                # (Cin, Cin)
    w32 = w.reshape(Cout, Cin).astype(jnp.float32)
    mean_y = w32 @ (s_tot / cnt)                                  # (Cout,) (bias omitted)
    e_y2 = jnp.einsum("oc,cd,od->o", w32, gram, w32) / cnt        # diag(W G W^T)/cnt
    # NOTE: E[y^2] - mean^2 can cancel for strongly shifted activations; clamped >= 0.
    var = jnp.maximum(e_y2 - mean_y * mean_y, 0.0)                # biased variance
    scale = gamma.astype(jnp.float32) * jax.lax.rsqrt(var + BN_EPS)
    shift = beta.astype(jnp.float32) - mean_y * scale

    # ---- Pass 2: conv + scale/shift + ReLU, lane-dense unmasked stores -------
    out3 = pl.pallas_call(
        bn_apply_kernel,
        out_shape=jax.ShapeDtypeStruct((N, Cout, HWp), x3.dtype),
        grid=(Ng, Mg),
        in_specs=[
            pl.BlockSpec((Nb, Cin, TM), lambda n, m: (n, 0, m)),
            pl.BlockSpec((Cout, Cin), lambda n, m: (0, 0)),
            pl.BlockSpec((Cout, 1), lambda n, m: (0, 0)),
            pl.BlockSpec((Cout, 1), lambda n, m: (0, 0)),
        ],
        out_specs=pl.BlockSpec((Nb, Cout, TM), lambda n, m: (n, 0, m)),
        compiler_params=pltpu.CompilerParams(
            dimension_semantics=("parallel", "parallel")),
    )(x3, w2, scale.reshape(Cout, 1), shift.reshape(Cout, 1))

    if HWp != HW:
        out3 = out3[:, :, :HW]
    return out3.reshape(N, Cout, H, W)


def reference_forward(x_nchw, w, b, gamma, beta):
    """Pure-JAX reference mirroring PyTorch Conv1x1.forward (training-mode BN)."""
    N, Cin, H, W = x_nchw.shape
    Cout = gamma.shape[0]
    x2d = jnp.transpose(x_nchw, (0, 2, 3, 1)).reshape(-1, Cin).astype(jnp.float32)
    y = x2d @ w.reshape(Cout, Cin).T.astype(jnp.float32) + b
    mean = jnp.mean(y, axis=0)
    var = jnp.mean((y - mean) ** 2, axis=0)
    y = (y - mean) / jnp.sqrt(var + BN_EPS) * gamma + beta
    y = jnp.maximum(y, 0.0)
    return jnp.transpose(y.reshape(N, H, W, Cout), (0, 3, 1, 2))


if __name__ == "__main__":
    key = jax.random.PRNGKey(0)
    k_x, k_w, k_b = jax.random.split(key, 3)

    N, Cin, H, W = 2, 4, 16, 16
    Cout = 8

    x = jax.random.normal(k_x, (N, Cin, H, W), dtype=jnp.float32)

    # Deterministic parameter init (synthetic, roughly matching PyTorch defaults).
    fan_in = float(Cin)  # 1x1 kernel -> fan_in = Cin
    bound = 1.0 / (fan_in ** 0.5)
    w = jax.random.uniform(k_w, (Cout, Cin), minval=-bound, maxval=bound,
                           dtype=jnp.float32)   # conv weight (Cout, Cin, 1, 1) squeezed
    b = jax.random.uniform(k_b, (Cout,), minval=-bound, maxval=bound,
                           dtype=jnp.float32)   # conv bias (cancels under BN)
    gamma = jnp.ones((Cout,), dtype=jnp.float32)  # BN weight
    beta = jnp.zeros((Cout,), dtype=jnp.float32)  # BN bias

    # TODO(synk): PyTorch BN also updates running_mean/running_var buffers in
    # training mode; that side effect is not part of the forward output here.
    out = conv1x1_forward(x, w, b, gamma, beta)
    out = jax.block_until_ready(out)

    ref = reference_forward(x, w, b, gamma, beta)
    assert out.shape == (N, Cout, H, W)
    assert jnp.allclose(out, ref, atol=1e-4, rtol=1e-4), float(jnp.max(jnp.abs(out - ref)))

    print("KERNEL_OK")
</pallas_src>

<mosaic_0001>
module attributes {stable_mosaic.version = 11 : i64} {
  func.func @bn_stats_kernel(%arg0: i32, %arg1: i32, %arg2: i32, %arg3: memref<2x4x256xf32, #tpu.memory_space<vmem>>, %arg4: memref<1x4x1xf32, #tpu.memory_space<vmem>>, %arg5: memref<1x4x4xf32, #tpu.memory_space<vmem>>) attributes {dimension_semantics = [#tpu.dimension_semantics<parallel>, #tpu.dimension_semantics<arbitrary>, #tpu.dimension_semantics<arbitrary>], iteration_bounds = array<i64: 1, 1, 1>, scalar_prefetch = 0 : i64, scratch_operands = 0 : i64, tpu.core_type = #tpu.core_type<tc>, window_params = [{transform_indices = @transform_0, window_bounds = array<i64: 2, 4, 256>}, {transform_indices = @transform_1, window_bounds = array<i64: 1, 4, 1>}, {transform_indices = @transform_2, window_bounds = array<i64: 1, 4, 4>}]} {
    %c0_i32 = arith.constant 0 : i32
    %0 = arith.cmpi eq, %arg1, %c0_i32 : i32
    %c0_i32_0 = arith.constant 0 : i32
    %1 = arith.cmpi eq, %arg2, %c0_i32_0 : i32
    %2 = arith.andi %0, %1 : i1
    %3 = arith.extui %2 : i1 to i32
    %c0_i32_1 = arith.constant 0 : i32
    %4 = arith.cmpi ne, %3, %c0_i32_1 : i32
    scf.if %4 {
      %cst_21 = arith.constant 0.000000e+00 : f32
      %29 = vector.broadcast %cst_21 : f32 to vector<4x1xf32>
      %c0_22 = arith.constant 0 : index
      %c0_23 = arith.constant 0 : index
      %c0_24 = arith.constant 0 : index
      %30 = vector.load %arg4[%c0_22, %c0_23, %c0_24] : memref<1x4x1xf32, #tpu.memory_space<vmem>>, vector<1x4x1xf32>
      %31 = vector.shape_cast %30 : vector<1x4x1xf32> to vector<4x1xf32>
      %32 = vector.shape_cast %29 : vector<4x1xf32> to vector<1x4x1xf32>
      tpu.vector_store %arg4[%c0_22, %c0_23, %c0_24], %32 {strides = array<i32>} : memref<1x4x1xf32, #tpu.memory_space<vmem>>, vector<1x4x1xf32>,
      %cst_25 = arith.constant 0.000000e+00 : f32
      %33 = vector.broadcast %cst_25 : f32 to vector<4x4xf32>
      %c0_26 = arith.constant 0 : index
      %c0_27 = arith.constant 0 : index
      %c0_28 = arith.constant 0 : index
      %34 = vector.load %arg5[%c0_26, %c0_27, %c0_28] : memref<1x4x4xf32, #tpu.memory_space<vmem>>, vector<1x4x4xf32>
      %35 = vector.shape_cast %34 : vector<1x4x4xf32> to vector<4x4xf32>
      %36 = vector.shape_cast %33 : vector<4x4xf32> to vector<1x4x4xf32>
      tpu.vector_store %arg5[%c0_26, %c0_27, %c0_28], %36 {strides = array<i32>} : memref<1x4x4xf32, #tpu.memory_space<vmem>>, vector<1x4x4xf32>,
    } else {
    }
    %c0 = arith.constant 0 : index
    %c0_2 = arith.constant 0 : index
    %c0_3 = arith.constant 0 : index
    %5 = vector.load %arg4[%c0, %c0_2, %c0_3] : memref<1x4x1xf32, #tpu.memory_space<vmem>>, vector<1x4x1xf32>
    %6 = vector.shape_cast %5 : vector<1x4x1xf32> to vector<4x1xf32>
    %c0_4 = arith.constant 0 : index
    %c0_5 = arith.constant 0 : index
    %c0_6 = arith.constant 0 : index
    %7 = vector.load %arg5[%c0_4, %c0_5, %c0_6] : memref<1x4x4xf32, #tpu.memory_space<vmem>>, vector<1x4x4xf32>
    %8 = vector.shape_cast %7 : vector<1x4x4xf32> to vector<4x4xf32>
    %c0_7 = arith.constant 0 : index
    %c0_8 = arith.constant 0 : index
    %c0_9 = arith.constant 0 : index
    %9 = vector.load %arg3[%c0_7, %c0_8, %c0_9] : memref<2x4x256xf32, #tpu.memory_space<vmem>>, vector<1x4x256xf32>
    %10 = vector.shape_cast %9 : vector<1x4x256xf32> to vector<4x256xf32>
    %cst = arith.constant dense<0.000000e+00> : vector<4xf32>
    %11 = vector.multi_reduction <add>, %10, %cst [1] : vector<4x256xf32> to vector<4xf32>
    %12 = vector.shape_cast %11 : vector<4xf32> to vector<4x1xf32>
    %13 = arith.addf %6, %12 : vector<4x1xf32>
    %cst_10 = arith.constant dense<0.000000e+00> : vector<4x4xf32>
    %14 = tpu.matmul %10, %10, %cst_10 {dimension_numbers = #tpu.dot_dimension_numbers<[1], [1], [0], [0], [0, 0, 1, 0], [], []>} : vector<4x256xf32>, vector<4x256xf32>, vector<4x4xf32> -> vector<4x4xf32>
    %15 = arith.addf %8, %14 : vector<4x4xf32>
    %c1 = arith.constant 1 : index
    %c0_11 = arith.constant 0 : index
    %c0_12 = arith.constant 0 : index
    %16 = vector.load %arg3[%c1, %c0_11, %c0_12] : memref<2x4x256xf32, #tpu.memory_space<vmem>>, vector<1x4x256xf32>
    %17 = vector.shape_cast %16 : vector<1x4x256xf32> to vector<4x256xf32>
    %cst_13 = arith.constant dense<0.000000e+00> : vector<4xf32>
    %18 = vector.multi_reduction <add>, %17, %cst_13 [1] : vector<4x256xf32> to vector<4xf32>
    %19 = vector.shape_cast %18 : vector<4xf32> to vector<4x1xf32>
    %20 = arith.addf %13, %19 : vector<4x1xf32>
    %cst_14 = arith.constant dense<0.000000e+00> : vector<4x4xf32>
    %21 = tpu.matmul %17, %17, %cst_14 {dimension_numbers = #tpu.dot_dimension_numbers<[1], [1], [0], [0], [0, 0, 1, 0], [], []>} : vector<4x256xf32>, vector<4x256xf32>, vector<4x4xf32> -> vector<4x4xf32>
    %22 = arith.addf %15, %21 : vector<4x4xf32>
    %c0_15 = arith.constant 0 : index
    %c0_16 = arith.constant 0 : index
    %c0_17 = arith.constant 0 : index
    %23 = vector.load %arg4[%c0_15, %c0_16, %c0_17] : memref<1x4x1xf32, #tpu.memory_space<vmem>>, vector<1x4x1xf32>
    %24 = vector.shape_cast %23 : vector<1x4x1xf32> to vector<4x1xf32>
    %25 = vector.shape_cast %20 : vector<4x1xf32> to vector<1x4x1xf32>
    tpu.vector_store %arg4[%c0_15, %c0_16, %c0_17], %25 {strides = array<i32>} : memref<1x4x1xf32, #tpu.memory_space<vmem>>, vector<1x4x1xf32>,
    %c0_18 = arith.constant 0 : index
    %c0_19 = arith.constant 0 : index
    %c0_20 = arith.constant 0 : index
    %26 = vector.load %arg5[%c0_18, %c0_19, %c0_20] : memref<1x4x4xf32, #tpu.memory_space<vmem>>, vector<1x4x4xf32>
    %27 = vector.shape_cast %26 : vector<1x4x4xf32> to vector<4x4xf32>
    %28 = vector.shape_cast %22 : vector<4x4xf32> to vector<1x4x4xf32>
    tpu.vector_store %arg5[%c0_18, %c0_19, %c0_20], %28 {strides = array<i32>} : memref<1x4x4xf32, #tpu.memory_space<vmem>>, vector<1x4x4xf32>,
    return
  }
  func.func @transform_0(%arg0: i32, %arg1: i32, %arg2: i32) -> (i32, i32, i32) {
    %c0_i32 = arith.constant 0 : i32
    %c0_i32_0 = arith.constant 0 : i32
    return %arg1, %c0_i32, %arg2 : i32, i32, i32
  }
  func.func @transform_1(%arg0: i32, %arg1: i32, %arg2: i32) -> (i32, i32, i32) {
    %c0_i32 = arith.constant 0 : i32
    %c0_i32_0 = arith.constant 0 : i32
    %c0_i32_1 = arith.constant 0 : i32
    return %arg0, %c0_i32, %c0_i32_0 : i32, i32, i32
  }
  func.func @transform_2(%arg0: i32, %arg1: i32, %arg2: i32) -> (i32, i32, i32) {
    %c0_i32 = arith.constant 0 : i32
    %c0_i32_0 = arith.constant 0 : i32
    %c0_i32_1 = arith.constant 0 : i32
    return %arg0, %c0_i32, %c0_i32_0 : i32, i32, i32
  }
}

</mosaic_0001>

<llo_original>
// kernel: tpu_custom_call.1
$region0: #{tpu_custom_call.1}
  #allocation0 [shape = 'u32[]', space=smem, size = 0x4, offset = 0x4, fixed_abs, tag = 'smem constant byte address 0x4 - core index']
  #allocation1 [shape = 'u32[144,128]{1,0:T(1,128)}', space=vmem, size = 0x12000, scoped, tag = 'internal scratch']
  %s0 = inlined_call_operand.hbm [shape: f32[2,4,256], index: 0, kind: input, shape index: {}]
  %s1 = inlined_call_operand.vmem [shape: f32[1,4,1], index: 1, kind: output, shape index: {0}]
  %s2 = inlined_call_operand.hbm [shape: f32[1,4,4], index: 2, kind: output, shape index: {1}]
  %3 = xla_tuple %s1, %s2
  %s4 = sld [smem:[#allocation0]]
  $region30: #{tpu_custom_call.1} parent=0
    _
  %s6 = ssub.s32 1, %s4
  %s7 = scalar_select 0, %s6, %s4
  $region1: #{tpu_custom_call.1} parent=0
    #allocation2 [shape = 'u8[8192]{0}', space=vmem, size = 0x2000, scoped, tag = 'input window, operand 0, single buffered']
    #allocation3 [shape = 's32[1]{0}', space=sflag, size = 0x4, scoped, tag = 'scoped memory for tpu_custom_call.1']
    #allocation4 [shape = 's32[1]{0}', space=sflag, size = 0x4, scoped, tag = 'scoped memory for tpu_custom_call.1']
    #allocation5 [shape = 'u8[2048]{0}', space=vmem, size = 0x800, scoped, tag = 'output window, operand 1, single buffered']
    %8 = vsyncpa [#allocation3], 0
    %9 = vsyncpa [#allocation4], 0
    // Predicated region
    $region2: #{tpu_custom_call.1} parent=1 // pred_check
      _
    $region3: #{tpu_custom_call.1} parent=1 // pred_check_branch
      %11 = sbr.rel (0) target = $region5
    $region4: #{tpu_custom_call.1} parent=1 // pred_region
      %s13 = ssub.s32 256, 256
      %14 = vsyncadd [#allocation3], %s13
      %s15 = sshll.u32 [#allocation2], 4
      %s16 = int_to_ptr.vmem [resolvable:$true] %s15
      %21 = dma.hbm_to_vmem [thread:$0]  %s0, 256, %s16, [#allocation3], 128, 128, 8
    $region5: #{tpu_custom_call.1} parent=1 // pred_fallthru
      _
    // Predicated region
    $region6: #{tpu_custom_call.1} parent=1 // pred_check
      _
    $region7: #{tpu_custom_call.1} parent=1 // pred_check_branch
      %23 = sbr.rel (0) target = $region9
    $region8: #{tpu_custom_call.1} parent=1 // pred_region
      %24 = dma.done [#allocation3], 256
    $region9: #{tpu_custom_call.1} parent=1 // pred_fallthru
      _
    %p25 = scmp.eq.s32.totalorder 0, 0
    %p26 = scmp.eq.s32.totalorder 0, 0
    %p27 = pnand %p25, %p26
    %p28 = pneg %p27
    // Predicated region
    $region10: #{tpu_custom_call.1} parent=1 // pred_check
      _
    $region11: #{tpu_custom_call.1} parent=1 // pred_check_branch
      %30 = sbr.rel (%p27) target = $region13
    $region12: #{tpu_custom_call.1} parent=1 // pred_region
      %vm31 = vcmask 3072
      %32 = vst.msk [vmem:[%s1] sm:$0xf] %vm31, 0.0
      %vm33 = vcmask 27648
      %34 = vst.msk [vmem:[#allocation5] sm:$0xf] %vm33, 0.0
    $region13: #{tpu_custom_call.1} parent=1 // pred_fallthru
      _
    %v35 = vld [vmem:[%s1] sm:$0xf]
    %v36 = vld [vmem:[#allocation5] sm:$0xf]
    %v37 = vld [vmem:[#allocation2] sm:$0xff]
    %v39 = vcombine.high %v37, %v37
    %vm41 = vcmask 1043456
    %v42 = vsel %vm41, %v37, 0.0
    %v43 = vsel %vm41, %v39, 0.0
    %v44 = vadd.f32 %v42, %v43
    %45 = vadd.xlane.f32.xlu0 %v44
    %v46 = vpop.xlane.xlu0 %45
    %v47 = vadd.f32 %v35, %v46
    %48 = vmatprep.subr.mxu0 %v39
    %49 = vmatpush1.xpose.msra.mxu0 %v37
    %50 = vmatprep.subr.mxu0 0.0
    %51 = vmatpush1.xpose.msra.mxu0 0.0
    %52 = vmatprep.subr.mxu0 0.0
    %53 = vmatpush1.xpose.msra.mxu0 0.0
    %54 = vmatprep.subr.mxu0 0.0
    %55 = vmatpush1.xpose.msra.mxu0 0.0
    %56 = vmatprep.subr.mxu0 0.0
    %57 = vmatpush1.xpose.msra.mxu0 0.0
    %58 = vmatprep.subr.mxu0 0.0
    %59 = vmatpush1.xpose.msra.mxu0 0.0
    %60 = vmatprep.subr.mxu0 0.0
    %61 = vmatpush1.xpose.msra.mxu0 0.0
    %62 = vmatprep.subr.mxu0 0.0
    %63 = vmatpush1.xpose.msra.mxu0 0.0
    %64 = vmatprep.subr.mxu0 0.0
    %65 = vmatpush1.xpose.msra.mxu0 0.0
    %66 = vmatprep.subr.mxu0 0.0
    %67 = vmatpush1.xpose.msra.mxu0 0.0
    %68 = vmatprep.subr.mxu0 0.0
    %69 = vmatpush1.xpose.msra.mxu0 0.0
    %70 = vmatprep.subr.mxu0 0.0
    %71 = vmatpush1.xpose.msra.mxu0 0.0
    %72 = vmatprep.subr.mxu0 0.0
    %73 = vmatpush1.xpose.msra.mxu0 0.0
    %74 = vmatprep.subr.mxu0 0.0
    %75 = vmatpush1.xpose.msra.mxu0 0.0
    %76 = vmatprep.subr.mxu0 0.0
    %77 = vmatpush1.xpose.msra.mxu0 0.0
    %78 = vmatprep.subr.mxu0 0.0
    %79 = vmatpush1.xpose.msra.mxu0 0.0
    %80 = vmatprep.subr.mxu0 0.0
    %81 = vmatpush1.xpose.msra.mxu0 0.0
    %82 = vmatprep.subr.mxu0 0.0
    %83 = vmatpush1.xpose.msra.mxu0 0.0
    %84 = vmatprep.subr.mxu0 0.0
    %85 = vmatpush1.xpose.msra.mxu0 0.0
    %86 = vmatprep.subr.mxu0 0.0
    %87 = vmatpush1.xpose.msra.mxu0 0.0
    %88 = vmatprep.subr.mxu0 0.0
    %89 = vmatpush1.xpose.msra.mxu0 0.0
    %90 = vmatprep.subr.mxu0 0.0
    %91 = vmatpush1.xpose.msra.mxu0 0.0
    %92 = vmatprep.subr.mxu0 0.0
    %93 = vmatpush1.xpose.msra.mxu0 0.0
    %94 = vmatprep.subr.mxu0 0.0
    %95 = vmatpush1.xpose.msra.mxu0 0.0
    %96 = vmatprep.subr.mxu0 0.0
    %97 = vmatpush1.xpose.msra.mxu0 0.0
    %98 = vmatprep.subr.mxu0 0.0
    %99 = vmatpush1.xpose.msra.mxu0 0.0
    %100 = vmatprep.subr.mxu0 0.0
    %101 = vmatpush1.xpose.msra.mxu0 0.0
    %102 = vmatprep.subr.mxu0 0.0
    %103 = vmatpush1.xpose.msra.mxu0 0.0
    %104 = vmatprep.subr.mxu0 0.0
    %105 = vmatpush1.xpose.msra.mxu0 0.0
    %106 = vmatprep.subr.mxu0 0.0
    %107 = vmatpush1.xpose.msra.mxu0 0.0
    %108 = vmatprep.subr.mxu0 0.0
    %109 = vmatpush1.xpose.msra.mxu0 0.0
    %110 = vmatprep.subr.mxu0 0.0
    %111 = vmatpush1.xpose.msra.mxu0 0.0
    %112 = vmatprep.mubr.f32.mxu0 %v39
    %113 = vmatmul.mubr.f32.gmra.mrb[0].mxu0 %v37
    %v114 = vpop.f32.mrb[0].mxu0
    %v115 = vadd.f32 0.0, %v114
    %v116 = vpop.f32.mrb[0].mxu0
    %117 = vdwg.mxu0
    %v118 = vadd.f32 %v36, %v115
    %s119 = scalar_lea.vmem [#allocation2], 8
    %v120 = vld [vmem:[%s119] sm:$0xff]
    %v122 = vcombine.high %v120, %v120
    %v124 = vsel %vm41, %v120, 0.0
    %v125 = vsel %vm41, %v122, 0.0
    %v126 = vadd.f32 %v124, %v125
    %127 = vadd.xlane.f32.xlu0 %v126
    %v128 = vpop.xlane.xlu0 %127
    %v129 = vadd.f32 %v47, %v128
    %130 = vmatprep.subr.mxu0 %v122
    %131 = vmatpush1.xpose.msra.mxu0 %v120
    %132 = vmatprep.subr.mxu0 0.0
    %133 = vmatpush1.xpose.msra.mxu0 0.0
    %134 = vmatprep.subr.mxu0 0.0
    %135 = vmatpush1.xpose.msra.mxu0 0.0
    %136 = vmatprep.subr.mxu0 0.0
    %137 = vmatpush1.xpose.msra.mxu0 0.0
    %138 = vmatprep.subr.mxu0 0.0
    %139 = vmatpush1.xpose.msra.mxu0 0.0
    %140 = vmatprep.subr.mxu0 0.0
    %141 = vmatpush1.xpose.msra.mxu0 0.0
    %142 = vmatprep.subr.mxu0 0.0
    %143 = vmatpush1.xpose.msra.mxu0 0.0
    %144 = vmatprep.subr.mxu0 0.0
    %145 = vmatpush1.xpose.msra.mxu0 0.0
    %146 = vmatprep.subr.mxu0 0.0
    %147 = vmatpush1.xpose.msra.mxu0 0.0
    %148 = vmatprep.subr.mxu0 0.0
    %149 = vmatpush1.xpose.msra.mxu0 0.0
    %150 = vmatprep.subr.mxu0 0.0
    %151 = vmatpush1.xpose.msra.mxu0 0.0
    %152 = vmatprep.subr.mxu0 0.0
    %153 = vmatpush1.xpose.msra.mxu0 0.0
    %154 = vmatprep.subr.mxu0 0.0
    %155 = vmatpush1.xpose.msra.mxu0 0.0
    %156 = vmatprep.subr.mxu0 0.0
    %157 = vmatpush1.xpose.msra.mxu0 0.0
    %158 = vmatprep.subr.mxu0 0.0
    %159 = vmatpush1.xpose.msra.mxu0 0.0
    %160 = vmatprep.subr.mxu0 0.0
    %161 = vmatpush1.xpose.msra.mxu0 0.0
    %162 = vmatprep.subr.mxu0 0.0
    %163 = vmatpush1.xpose.msra.mxu0 0.0
    %164 = vmatprep.subr.mxu0 0.0
    %165 = vmatpush1.xpose.msra.mxu0 0.0
    %166 = vmatprep.subr.mxu0 0.0
    %167 = vmatpush1.xpose.msra.mxu0 0.0
    %168 = vmatprep.subr.mxu0 0.0
    %169 = vmatpush1.xpose.msra.mxu0 0.0
    %170 = vmatprep.subr.mxu0 0.0
    %171 = vmatpush1.xpose.msra.mxu0 0.0
    %172 = vmatprep.subr.mxu0 0.0
    %173 = vmatpush1.xpose.msra.mxu0 0.0
    %174 = vmatprep.subr.mxu0 0.0
    %175 = vmatpush1.xpose.msra.mxu0 0.0
    %176 = vmatprep.subr.mxu0 0.0
    %177 = vmatpush1.xpose.msra.mxu0 0.0
    %178 = vmatprep.subr.mxu0 0.0
    %179 = vmatpush1.xpose.msra.mxu0 0.0
    %180 = vmatprep.subr.mxu0 0.0
    %181 = vmatpush1.xpose.msra.mxu0 0.0
    %182 = vmatprep.subr.mxu0 0.0
    %183 = vmatpush1.xpose.msra.mxu0 0.0
    %184 = vmatprep.subr.mxu0 0.0
    %185 = vmatpush1.xpose.msra.mxu0 0.0
    %186 = vmatprep.subr.mxu0 0.0
    %187 = vmatpush1.xpose.msra.mxu0 0.0
    %188 = vmatprep.subr.mxu0 0.0
    %189 = vmatpush1.xpose.msra.mxu0 0.0
    %190 = vmatprep.subr.mxu0 0.0
    %191 = vmatpush1.xpose.msra.mxu0 0.0
    %192 = vmatprep.subr.mxu0 0.0
    %193 = vmatpush1.xpose.msra.mxu0 0.0
    %194 = vmatprep.mubr.f32.mxu0 %v122
    %195 = vmatmul.mubr.f32.gmra.mrb[0].mxu0 %v120
    %v196 = vpop.f32.mrb[0].mxu0
    %v197 = vadd.f32 0.0, %v196
    %v198 = vpop.f32.mrb[0].mxu0
    %199 = vdwg.mxu0
    %v200 = vadd.f32 %v118, %v197
    %vm201 = vcmask 3072
    %202 = vst.msk [vmem:[%s1] sm:$0xf] %vm201, %v129
    %vm203 = vcmask 27648
    %204 = vst.msk [vmem:[#allocation5] sm:$0xf] %vm203, %v200
    // Predicated region
    $region14: #{tpu_custom_call.1} parent=1 // pred_check
      _
    $region15: #{tpu_custom_call.1} parent=1 // pred_check_branch
      %206 = sbr.rel (0) target = $region17
    $region16: #{tpu_custom_call.1} parent=1 // pred_region
      _
    $region17: #{tpu_custom_call.1} parent=1 // pred_fallthru
      _
    // Predicated region
    $region18: #{tpu_custom_call.1} parent=1 // pred_check
      _
    $region19: #{tpu_custom_call.1} parent=1 // pred_check_branch
      %208 = sbr.rel (0) target = $region21
    $region20: #{tpu_custom_call.1} parent=1 // pred_region
      %s210 = ssub.s32 64, 64
      %211 = vsyncadd [#allocation4], %s210
      %s213 = sshll.u32 [#allocation5], 4
      %s214 = int_to_ptr.vmem [resolvable:$true] %s213
      %216 = dma.vmem_to_hbm [thread:$0]  %s214, 64, %s2, [#allocation4]
    $region21: #{tpu_custom_call.1} parent=1 // pred_fallthru
      _
    // Predicated region
    $region22: #{tpu_custom_call.1} parent=1 // pred_check
      _
    $region23: #{tpu_custom_call.1} parent=1 // pred_check_branch
      %218 = sbr.rel (0) target = $region25
    $region24: #{tpu_custom_call.1} parent=1 // pred_region
      _
    $region25: #{tpu_custom_call.1} parent=1 // pred_fallthru
      _
    // Predicated region
    $region26: #{tpu_custom_call.1} parent=1 // pred_check
      _
    $region27: #{tpu_custom_call.1} parent=1 // pred_check_branch
      %220 = sbr.rel (0) target = $region29
    $region28: #{tpu_custom_call.1} parent=1 // pred_region
      %221 = dma.done [#allocation4], 64
    $region29: #{tpu_custom_call.1} parent=1 // pred_fallthru
      _
    %222 = vsyncpa [#allocation3], 1
    %223 = vsyncpa [#allocation4], 1

</llo_original>
